<compile_context>
chip_gen: v5e
topology: v5e:2x2
jax: 0.10.0
libtpu: 0.0.40
codegen_flags: <defaults>
</compile_context>

<pallas_src>
import math

import jax
import jax.numpy as jnp
from jax import lax
from jax.experimental import pallas as pl
from jax.experimental.pallas import tpu as pltpu


def _round_up(n, m):
    return ((n + m - 1) // m) * m


def _cdiv(a, b):
    return (a + b - 1) // b


def _mlp_kernel(x_ref, w1_ref, b1_ref, w2_ref, b2_ref, w3_ref, b3_ref, o_ref):
    """Fused 3-layer MLP; batch lives on the lane axis of every intermediate."""
    w1 = w1_ref[...]                                   # (H, D)  matmul dtype
    w2 = w2_ref[...]                                   # (H2, H) matmul dtype
    x = x_ref[...].astype(w1.dtype)                    # (TB, D) cast of a tiny tile

    # Layer 1: contract both minor dims (W1 @ x^T) so the MXU eats the
    # transpose; result (H, TB) is batch-on-lanes, f32 accumulation.
    h1 = lax.dot_general(w1, x, (((1,), (1,)), ((), ())),
                         preferred_element_type=jnp.float32)
    h1 = jnp.maximum(h1 + b1_ref[...], 0.0)            # (H, TB), VPU

    # Layer 2: (H2, H) @ (H, TB) on the MXU.
    h2 = jnp.dot(w2, h1.astype(w2.dtype), preferred_element_type=jnp.float32)
    h2 = jnp.maximum(h2 + b2_ref[...], 0.0)            # (H2, TB)

    # Layer 3 (H2 -> 1): VPU broadcast-multiply + XLU sublane reduce (no N=1
    # MXU pass); result already lane-dense (1, TB). b3 is an SMEM scalar.
    logits = jnp.sum(h2 * w3_ref[...], axis=0, keepdims=True) + b3_ref[0, 0]

    # TODO(synk): Dropout is an inference-mode no-op (matches model.eval()).
    o_ref[...] = jax.nn.sigmoid(logits).astype(o_ref.dtype)


def simple_heart_attack_predictor(x, params, *, block_batch=16384,
                                  matmul_dtype=jnp.bfloat16):
    """One pallas_call: batch-tiled, weights resident, lane-dense output row."""
    w1, b1, w2, b2, w3, b3 = params            # PyTorch layout: (out, in), (out,)
    B, D = x.shape
    H = w1.shape[0]
    H2 = w2.shape[0]

    # Batch tile: multiple of 128 (lane width).  Small batches use one tile;
    # for B > 256 cap at ceil(B/2) so there are >= 2 grid steps (both v7x TCs
    # get work), otherwise use the large default tile to amortize step overhead.
    if B <= 256:
        tb = _round_up(B, 128)
    else:
        tb = max(128, min(_round_up(block_batch, 128),
                          _round_up(_cdiv(B, 2), 128)))
    num_tiles = _cdiv(B, tb)
    b_pad = num_tiles * tb

    # Weights stay in their natural (out, in) layout; biases as columns.
    w1c = w1.astype(matmul_dtype)                            # (H, D)
    w2c = w2.astype(matmul_dtype)                            # (H2, H)
    b1c = b1.reshape(H, 1).astype(jnp.float32)
    b2c = b2.reshape(H2, 1).astype(jnp.float32)
    w3c = w3.reshape(H2, 1).astype(jnp.float32)              # (1, H2) -> column
    b3c = b3.reshape(1, 1).astype(jnp.float32)               # SMEM scalar

    const = lambda i: (0, 0)                                 # residents: DMA'd once
    x_buf = pl.Buffered(3 if num_tiles >= 3 else 2)          # deeper pipe for v5e

    grid_spec = pltpu.PrefetchScalarGridSpec(
        num_scalar_prefetch=0,
        grid=(num_tiles,),
        in_specs=[
            # Stream x row-tiles directly from HBM, caller dtype, no pre-pass.
            pl.BlockSpec((tb, D), lambda i: (i, 0), pipeline_mode=x_buf),
            pl.BlockSpec((H, D), const),
            pl.BlockSpec((H, 1), const),
            pl.BlockSpec((H2, H), const),
            pl.BlockSpec((H2, 1), const),
            pl.BlockSpec((H2, 1), const),
            pl.BlockSpec(memory_space=pltpu.MemorySpace.SMEM),   # b3 scalar
        ],
        out_specs=pl.BlockSpec((1, tb), lambda i: (0, i)),   # lane-dense output row
    )

    param_bytes = sum(int(p.size) * p.dtype.itemsize
                      for p in (w1c, b1c, w2c, b2c, w3c, b3c))
    x_itemsize = x.dtype.itemsize
    cost = pl.CostEstimate(
        flops=int(2 * b_pad * (D * H + H * H2 + H2)),
        transcendentals=int(2 * b_pad),                      # sigmoid ~ exp + recip
        bytes_accessed=int(B * D * x_itemsize + param_bytes + b_pad * 4),
    )

    # VMEM budget from the real residents (buffered x tiles, output rows, f32
    # intermediates, weights) with headroom; cap at 48 MiB so big tiles stay
    # safe under v7x's 64 MiB physical VMEM (v5e/v6e have 128 MiB).
    tile_bytes = (3 * tb * D * x_itemsize                    # up-to-3x-buffered x tile
                  + 2 * tb * 4                               # 2x-buffered (1, tb) out
                  + (H + H2) * tb * 4)                       # f32 h1 / h2
    vmem_limit = int(min(48 * 1024 * 1024,
                         max(16 * 1024 * 1024,
                             2 * tile_bytes + param_bytes + (4 << 20))))

    out = pl.pallas_call(
        _mlp_kernel,
        grid_spec=grid_spec,
        out_shape=jax.ShapeDtypeStruct((1, b_pad), jnp.float32),
        compiler_params=pltpu.CompilerParams(
            dimension_semantics=("parallel",),               # shard batch over TCs
            vmem_limit_bytes=vmem_limit,
        ),
        cost_estimate=cost,
    )(x, w1c, b1c, w2c, b2c, w3c, b3c)

    return out[0, :B][:, None]                               # back to (B, 1)


def xavier_uniform(key, out_features, in_features, dtype=jnp.float32):
    """Matches nn.init.xavier_uniform_ (gain=1) for a (out, in) weight."""
    bound = math.sqrt(6.0 / (in_features + out_features))
    return jax.random.uniform(key, (out_features, in_features), dtype=dtype,
                              minval=-bound, maxval=bound)


def init_params(key, input_dim, hidden_dim):
    h2 = hidden_dim // 2
    k1, k2, k3 = jax.random.split(key, 3)
    w1 = xavier_uniform(k1, hidden_dim, input_dim)           # (H, D)
    b1 = jnp.zeros((hidden_dim,), jnp.float32)
    w2 = xavier_uniform(k2, h2, hidden_dim)                  # (H//2, H)
    b2 = jnp.zeros((h2,), jnp.float32)
    w3 = xavier_uniform(k3, 1, h2)                           # (1, H//2)
    b3 = jnp.zeros((1,), jnp.float32)
    return (w1, b1, w2, b2, w3, b3)


def reference_forward(x, params):
    """Pure-JAX f32 reference (PyTorch semantics: y = x @ W^T + b)."""
    w1, b1, w2, b2, w3, b3 = params
    h1 = jnp.maximum(x @ w1.T + b1, 0.0)
    h2 = jnp.maximum(h1 @ w2.T + b2, 0.0)
    return jax.nn.sigmoid(h2 @ w3.T + b3)


if __name__ == "__main__":
    input_dim = 16
    hidden_dim = 32
    batch = 8

    key = jax.random.PRNGKey(0)
    k_params, k_x = jax.random.split(key)
    params = init_params(k_params, input_dim, hidden_dim)
    x = jax.random.normal(k_x, (batch, input_dim), dtype=jnp.float32)

    out = simple_heart_attack_predictor(x, params)
    out = jax.block_until_ready(out)

    ref = reference_forward(x, params)
    assert out.shape == (batch, 1), out.shape
    # bf16 MXU operands with f32 accumulation: compare against the pure-f32
    # reference with a correspondingly loosened tolerance.
    assert jnp.allclose(out, ref, atol=2e-2, rtol=0.0), (out, ref)

    print("KERNEL_OK")
</pallas_src>

<mosaic_0001>
module attributes {stable_mosaic.version = 11 : i64} {
  func.func @_mlp_kernel(%arg0: i32, %arg1: memref<128x16xf32, #tpu.memory_space<vmem>>, %arg2: memref<32x16xbf16, #tpu.memory_space<vmem>>, %arg3: memref<32x1xf32, #tpu.memory_space<vmem>>, %arg4: memref<16x32xbf16, #tpu.memory_space<vmem>>, %arg5: memref<16x1xf32, #tpu.memory_space<vmem>>, %arg6: memref<16x1xf32, #tpu.memory_space<vmem>>, %arg7: memref<1x1xf32, #tpu.memory_space<smem>>, %arg8: memref<1x128xf32, #tpu.memory_space<vmem>>) attributes {dimension_semantics = [#tpu.dimension_semantics<parallel>], iteration_bounds = array<i64: 1>, scalar_prefetch = 0 : i64, scratch_operands = 0 : i64, tpu.core_type = #tpu.core_type<tc>, window_params = [{pipeline_mode = #tpu.pipeline_mode<double_buffered>, transform_indices = @transform_0, window_bounds = array<i64: 128, 16>}, {pipeline_mode = #tpu.pipeline_mode<synchronous>, transform_indices = @transform_1, window_bounds = array<i64: 32, 16>}, {pipeline_mode = #tpu.pipeline_mode<synchronous>, transform_indices = @transform_2, window_bounds = array<i64: 32, 1>}, {pipeline_mode = #tpu.pipeline_mode<synchronous>, transform_indices = @transform_3, window_bounds = array<i64: 16, 32>}, {pipeline_mode = #tpu.pipeline_mode<synchronous>, transform_indices = @transform_4, window_bounds = array<i64: 16, 1>}, {pipeline_mode = #tpu.pipeline_mode<synchronous>, transform_indices = @transform_5, window_bounds = array<i64: 16, 1>}, {transform_indices = @transform_6, window_bounds = array<i64: 1, 1>}, {transform_indices = @transform_7, window_bounds = array<i64: 1, 128>}]} {
    %c0 = arith.constant 0 : index
    %c0_0 = arith.constant 0 : index
    %0 = vector.load %arg2[%c0, %c0_0] : memref<32x16xbf16, #tpu.memory_space<vmem>>, vector<32x16xbf16>
    %c0_1 = arith.constant 0 : index
    %c0_2 = arith.constant 0 : index
    %1 = vector.load %arg4[%c0_1, %c0_2] : memref<16x32xbf16, #tpu.memory_space<vmem>>, vector<16x32xbf16>
    %c0_3 = arith.constant 0 : index
    %c0_4 = arith.constant 0 : index
    %2 = vector.load %arg1[%c0_3, %c0_4] : memref<128x16xf32, #tpu.memory_space<vmem>>, vector<128x16xf32>
    %3 = arith.truncf %2 : vector<128x16xf32> to vector<128x16xbf16>
    %cst = arith.constant dense<0.000000e+00> : vector<32x128xf32>
    %4 = tpu.matmul %0, %3, %cst {dimension_numbers = #tpu.dot_dimension_numbers<[1], [1], [0], [0], [0, 0, 1, 0], [], []>} : vector<32x16xbf16>, vector<128x16xbf16>, vector<32x128xf32> -> vector<32x128xf32>
    %c0_5 = arith.constant 0 : index
    %c0_6 = arith.constant 0 : index
    %5 = vector.load %arg3[%c0_5, %c0_6] : memref<32x1xf32, #tpu.memory_space<vmem>>, vector<32x1xf32>
    %6 = vector.broadcast %5 : vector<32x1xf32> to vector<32x128xf32>
    %7 = arith.addf %4, %6 : vector<32x128xf32>
    %cst_7 = arith.constant 0.000000e+00 : f32
    %8 = vector.broadcast %cst_7 : f32 to vector<32x128xf32>
    %9 = arith.maximumf %7, %8 : vector<32x128xf32>
    %10 = arith.truncf %9 : vector<32x128xf32> to vector<32x128xbf16>
    %cst_8 = arith.constant dense<0.000000e+00> : vector<16x128xf32>
    %11 = tpu.matmul %1, %10, %cst_8 {dimension_numbers = #tpu.dot_dimension_numbers<[1], [0], [0], [1], [0, 0, 1, 1], [], []>} : vector<16x32xbf16>, vector<32x128xbf16>, vector<16x128xf32> -> vector<16x128xf32>
    %c0_9 = arith.constant 0 : index
    %c0_10 = arith.constant 0 : index
    %12 = vector.load %arg5[%c0_9, %c0_10] : memref<16x1xf32, #tpu.memory_space<vmem>>, vector<16x1xf32>
    %13 = vector.broadcast %12 : vector<16x1xf32> to vector<16x128xf32>
    %14 = arith.addf %11, %13 : vector<16x128xf32>
    %cst_11 = arith.constant 0.000000e+00 : f32
    %15 = vector.broadcast %cst_11 : f32 to vector<16x128xf32>
    %16 = arith.maximumf %14, %15 : vector<16x128xf32>
    %c0_12 = arith.constant 0 : index
    %c0_13 = arith.constant 0 : index
    %17 = vector.load %arg6[%c0_12, %c0_13] : memref<16x1xf32, #tpu.memory_space<vmem>>, vector<16x1xf32>
    %18 = vector.broadcast %17 : vector<16x1xf32> to vector<16x128xf32>
    %19 = arith.mulf %16, %18 : vector<16x128xf32>
    %cst_14 = arith.constant dense<0.000000e+00> : vector<128xf32>
    %20 = vector.multi_reduction <add>, %19, %cst_14 [0] : vector<16x128xf32> to vector<128xf32>
    %21 = vector.shape_cast %20 : vector<128xf32> to vector<1x128xf32>
    %c0_15 = arith.constant 0 : index
    %c0_16 = arith.constant 0 : index
    %22 = memref.load %arg7[%c0_15, %c0_16] : memref<1x1xf32, #tpu.memory_space<smem>>
    %23 = vector.broadcast %22 : f32 to vector<1x128xf32>
    %24 = arith.addf %21, %23 : vector<1x128xf32>
    %25 = arith.negf %24 : vector<1x128xf32>
    %26 = math.exp %25 : vector<1x128xf32>
    %cst_17 = arith.constant 1.000000e+00 : f32
    %27 = vector.broadcast %cst_17 : f32 to vector<1x128xf32>
    %28 = arith.addf %27, %26 : vector<1x128xf32>
    %29 = arith.divf %27, %28 : vector<1x128xf32>
    %c0_18 = arith.constant 0 : index
    %c0_19 = arith.constant 0 : index
    %30 = vector.load %arg8[%c0_18, %c0_19] : memref<1x128xf32, #tpu.memory_space<vmem>>, vector<1x128xf32>
    tpu.vector_store %arg8[%c0_18, %c0_19], %29 {strides = array<i32>} : memref<1x128xf32, #tpu.memory_space<vmem>>, vector<1x128xf32>,
    return
  }
  func.func @transform_0(%arg0: i32) -> (i32, i32) {
    %c0_i32 = arith.constant 0 : i32
    %c0_i32_0 = arith.constant 0 : i32
    return %arg0, %c0_i32 : i32, i32
  }
  func.func @transform_1(%arg0: i32) -> (i32, i32) {
    %c0_i32 = arith.constant 0 : i32
    %c0_i32_0 = arith.constant 0 : i32
    %c0_i32_1 = arith.constant 0 : i32
    return %c0_i32, %c0_i32_0 : i32, i32
  }
  func.func @transform_2(%arg0: i32) -> (i32, i32) {
    %c0_i32 = arith.constant 0 : i32
    %c0_i32_0 = arith.constant 0 : i32
    %c0_i32_1 = arith.constant 0 : i32
    return %c0_i32, %c0_i32_0 : i32, i32
  }
  func.func @transform_3(%arg0: i32) -> (i32, i32) {
    %c0_i32 = arith.constant 0 : i32
    %c0_i32_0 = arith.constant 0 : i32
    %c0_i32_1 = arith.constant 0 : i32
    return %c0_i32, %c0_i32_0 : i32, i32
  }
  func.func @transform_4(%arg0: i32) -> (i32, i32) {
    %c0_i32 = arith.constant 0 : i32
    %c0_i32_0 = arith.constant 0 : i32
    %c0_i32_1 = arith.constant 0 : i32
    return %c0_i32, %c0_i32_0 : i32, i32
  }
  func.func @transform_5(%arg0: i32) -> (i32, i32) {
    %c0_i32 = arith.constant 0 : i32
    %c0_i32_0 = arith.constant 0 : i32
    %c0_i32_1 = arith.constant 0 : i32
    return %c0_i32, %c0_i32_0 : i32, i32
  }
  func.func @transform_6(%arg0: i32) -> (i32, i32) {
    %c0_i32 = arith.constant 0 : i32
    %c0_i32_0 = arith.constant 0 : i32
    %c0_i32_1 = arith.constant 0 : i32
    return %c0_i32, %c0_i32_0 : i32, i32
  }
  func.func @transform_7(%arg0: i32) -> (i32, i32) {
    %c0_i32 = arith.constant 0 : i32
    %c0_i32_0 = arith.constant 0 : i32
    return %c0_i32, %arg0 : i32, i32
  }
}

</mosaic_0001>

<llo_original>
// kernel: tpu_custom_call.1
$region0: #{tpu_custom_call.1}
  #allocation0 [shape = 'u32[]', space=smem, size = 0x4, offset = 0x4, fixed_abs, tag = 'smem constant byte address 0x4 - core index']
  #allocation1 [shape = 'u32[72,128]{1,0:T(1,128)}', space=vmem, size = 0x9000, scoped, tag = 'internal scratch']
  #allocation2 [shape = 'f32[1,1]{1,0:T(1,128)S(6)}', space=smem, size = 0x200, scoped, tag = 'scoped memory for tpu_custom_call.1']
  %s0 = inlined_call_operand.vmem [shape: f32[8,16], index: 0, kind: input, shape index: {}]
  %s1 = inlined_call_operand.vmem [shape: bf16[32,16], index: 1, kind: input, shape index: {}]
  %s2 = inlined_call_operand.vmem [shape: f32[32,1], index: 2, kind: input, shape index: {}]
  %s3 = inlined_call_operand.vmem [shape: bf16[16,32], index: 3, kind: input, shape index: {}]
  %s4 = inlined_call_operand.vmem [shape: f32[16,1], index: 4, kind: input, shape index: {}]
  %s5 = inlined_call_operand.vmem [shape: f32[16,1], index: 5, kind: input, shape index: {}]
  %s6 = inlined_call_operand.<no memory space> [shape: f32[1,1], index: 6, kind: input, shape index: {}]
  %s7 = inlined_call_operand.hbm [shape: f32[1,128], index: 7, kind: output, shape index: {}]
  %s8 = sld [smem:[#allocation0]]
  $region38: #{tpu_custom_call.1} parent=0
    _
  %s10 = ssub.s32 1, %s8
  %s11 = scalar_select 0, %s10, %s8
  %12 = sst [smem:[#allocation2]] %s6
  $region1: #{tpu_custom_call.1} parent=0
    #allocation3 [shape = 'u8[512]{0}', space=vmem, size = 0x400, scoped, tag = 'output window, operand 0, single buffered']
    #allocation4 [shape = 's32[1]{0}', space=sflag, size = 0x4, scoped, tag = 'scoped memory for tpu_custom_call.1']
    %13 = vsyncpa [#allocation4], 0
    // Predicated region
    $region2: #{tpu_custom_call.1} parent=1 // pred_check
      _
    $region3: #{tpu_custom_call.1} parent=1 // pred_check_branch
      %15 = sbr.rel (0) target = $region5
    $region4: #{tpu_custom_call.1} parent=1 // pred_region
      _
    $region5: #{tpu_custom_call.1} parent=1 // pred_fallthru
      _
    // Predicated region
    $region6: #{tpu_custom_call.1} parent=1 // pred_check
      _
    $region7: #{tpu_custom_call.1} parent=1 // pred_check_branch
      %17 = sbr.rel (0) target = $region9
    $region8: #{tpu_custom_call.1} parent=1 // pred_region
      _
    $region9: #{tpu_custom_call.1} parent=1 // pred_fallthru
      _
    // Predicated region
    $region10: #{tpu_custom_call.1} parent=1 // pred_check
      _
    $region11: #{tpu_custom_call.1} parent=1 // pred_check_branch
      %19 = sbr.rel (0) target = $region13
    $region12: #{tpu_custom_call.1} parent=1 // pred_region
      _
    $region13: #{tpu_custom_call.1} parent=1 // pred_fallthru
      _
    // Predicated region
    $region14: #{tpu_custom_call.1} parent=1 // pred_check
      _
    $region15: #{tpu_custom_call.1} parent=1 // pred_check_branch
      %21 = sbr.rel (0) target = $region17
    $region16: #{tpu_custom_call.1} parent=1 // pred_region
      _
    $region17: #{tpu_custom_call.1} parent=1 // pred_fallthru
      _
    // Predicated region
    $region18: #{tpu_custom_call.1} parent=1 // pred_check
      _
    $region19: #{tpu_custom_call.1} parent=1 // pred_check_branch
      %23 = sbr.rel (0) target = $region21
    $region20: #{tpu_custom_call.1} parent=1 // pred_region
      _
    $region21: #{tpu_custom_call.1} parent=1 // pred_fallthru
      _
    // Predicated region
    $region22: #{tpu_custom_call.1} parent=1 // pred_check
      _
    $region23: #{tpu_custom_call.1} parent=1 // pred_check_branch
      %25 = sbr.rel (0) target = $region25
    $region24: #{tpu_custom_call.1} parent=1 // pred_region
      _
    $region25: #{tpu_custom_call.1} parent=1 // pred_fallthru
      _
    // Predicated region
    $region26: #{tpu_custom_call.1} parent=1 // pred_check
      _
    $region27: #{tpu_custom_call.1} parent=1 // pred_check_branch
      %27 = sbr.rel (0) target = $region29
    $region28: #{tpu_custom_call.1} parent=1 // pred_region
      _
    $region29: #{tpu_custom_call.1} parent=1 // pred_fallthru
      _
    %v29 = vld [vmem:[%s1] sm:$0xf]
    %v30 = vld [vmem:[%s1 + $0x4] sm:$0xf]
    %v31 = vld [vmem:[%s1 + $0x8] sm:$0xf]
    %v32 = vld [vmem:[%s1 + $0xc] sm:$0xf]
    %v33 = vld [vmem:[%s3] sm:$0xf]
    %v34 = vld [vmem:[%s3 + $0x4] sm:$0xf]
    %v35 = vld [vmem:[%s0] sm:$0xff]
    %v36 = vld [vmem:[%s0 + $0x8] sm:$0xff]
    %v37 = vld [vmem:[%s0 + $0x10] sm:$0xff]
    %v38 = vld [vmem:[%s0 + $0x18] sm:$0xff]
    %v39 = vld [vmem:[%s0 + $0x20] sm:$0xff]
    %v40 = vld [vmem:[%s0 + $0x28] sm:$0xff]
    %v41 = vld [vmem:[%s0 + $0x30] sm:$0xff]
    %v42 = vld [vmem:[%s0 + $0x38] sm:$0xff]
    %v43 = vld [vmem:[%s0 + $0x40] sm:$0xff]
    %v44 = vld [vmem:[%s0 + $0x48] sm:$0xff]
    %v45 = vld [vmem:[%s0 + $0x50] sm:$0xff]
    %v46 = vld [vmem:[%s0 + $0x58] sm:$0xff]
    %v47 = vld [vmem:[%s0 + $0x60] sm:$0xff]
    %v48 = vld [vmem:[%s0 + $0x68] sm:$0xff]
    %v49 = vld [vmem:[%s0 + $0x70] sm:$0xff]
    %v50 = vld [vmem:[%s0 + $0x78] sm:$0xff]
    %v51 = vpack.c.bf16 %v36, %v35
    %v52 = vpack.c.bf16 %v38, %v37
    %v53 = vpack.c.bf16 %v40, %v39
    %v54 = vpack.c.bf16 %v42, %v41
    %v55 = vpack.c.bf16 %v44, %v43
    %v56 = vpack.c.bf16 %v46, %v45
    %v57 = vpack.c.bf16 %v48, %v47
    %v58 = vpack.c.bf16 %v50, %v49
    %v59 = vld [vmem:[%s2] sm:$0xff]
    %v60 = vld [vmem:[%s2 + $0x8] sm:$0xff]
    %v61 = vld [vmem:[%s2 + $0x10] sm:$0xff]
    %v62 = vld [vmem:[%s2 + $0x18] sm:$0xff]
    %64 = vset.pattern.permute.xlu0 0
    %65 = vperm.xlu0 %64, %v59
    %v66 = vpop.permute.xlu0 %65
    %69 = vset.pattern.permute.xlu0 0
    %70 = vperm.xlu0 %69, %v60
    %v71 = vpop.permute.xlu0 %70
    %74 = vset.pattern.permute.xlu0 0
    %75 = vperm.xlu0 %74, %v61
    %v76 = vpop.permute.xlu0 %75
    %79 = vset.pattern.permute.xlu0 0
    %80 = vperm.xlu0 %79, %v62
    %v81 = vpop.permute.xlu0 %80
    %v87 = vunpack.c.l.b16 %v29
    %v88 = vunpack.c.l.b16 %v30
    %v89 = vunpack.c.l.b16 %v31
    %v90 = vunpack.c.l.b16 %v32
    %v91 = vpack.c.b16 %v88, %v87
    %v92 = vpack.c.b16 %v90, %v89
    %vm93 = vcmask 130048
    %v95 = vsel %vm93, %v91, 0
    %v98 = vsel %vm93, %v92, 0
    %v101 = vsel %vm93, %v51, 0
    %v104 = vsel %vm93, %v52, 0
    %v107 = vsel %vm93, %v53, 0
    %v110 = vsel %vm93, %v54, 0
    %v113 = vsel %vm93, %v55, 0
    %v116 = vsel %vm93, %v56, 0
    %v119 = vsel %vm93, %v57, 0
    %v122 = vsel %vm93, %v58, 0
    %124 = vmatpush.bf16.xpose.msra.mxu0 %v122
    %125 = vmatpush.bf16.xpose.msra.mxu0 %v119
    %126 = vmatpush.bf16.xpose.msra.mxu0 %v116
    %127 = vmatpush.bf16.xpose.msra.mxu0 %v113
    %128 = vmatpush.bf16.xpose.msra.mxu0 %v110
    %129 = vmatpush.bf16.xpose.msra.mxu0 %v107
    %130 = vmatpush.bf16.xpose.msra.mxu0 %v104
    %131 = vmatpush.bf16.xpose.msra.mxu0 %v101
    %132 = vmatmul.bf16.gmra.mxu0 %v95
    %v133 = vpop.f32.mrf.mxu0
    %v134 = vadd.f32 %v66, %v133
    %v135 = vpop.f32.mrf.mxu0
    %v136 = vadd.f32 %v71, %v135
    %137 = vmatmul.bf16.gmra.mxu0 %v98
    %v138 = vpop.f32.mrf.mxu0
    %v139 = vadd.f32 %v76, %v138
    %v140 = vpop.f32.mrf.mxu0
    %v141 = vadd.f32 %v81, %v140
    %142 = vdwg.mxu0
    %v143 = vmax.f32 %v134, 0.0
    %v144 = vmax.f32 %v136, 0.0
    %v145 = vmax.f32 %v139, 0.0
    %v146 = vmax.f32 %v141, 0.0
    %v147 = vpack.c.bf16 %v144, %v143
    %v148 = vpack.c.bf16 %v146, %v145
    %v149 = vld [vmem:[%s4] sm:$0xff]
    %v150 = vld [vmem:[%s4 + $0x8] sm:$0xff]
    %152 = vset.pattern.permute.xlu0 0
    %153 = vperm.xlu0 %152, %v149
    %v154 = vpop.permute.xlu0 %153
    %157 = vset.pattern.permute.xlu0 0
    %158 = vperm.xlu0 %157, %v150
    %v159 = vpop.permute.xlu0 %158
    %v163 = vunpack.c.l.b16 %v33
    %v164 = vunpack.c.l.b16 %v34
    %v165 = vpack.c.b16 %v164, %v163
    %vm166 = vcmask 261120
    %v168 = vsel %vm166, %v165, 0
    %170 = vmatpush.bf16.msra.mxu0 0
    %171 = vmatpush.bf16.msra.mxu0 0
    %172 = vmatpush.bf16.msra.mxu0 0
    %173 = vmatpush.bf16.msra.mxu0 0
    %174 = vmatpush.bf16.msra.mxu0 0
    %175 = vmatpush.bf16.msra.mxu0 0
    %176 = vmatpush.bf16.msra.mxu0 %v148
    %177 = vmatpush.bf16.msra.mxu0 %v147
    %178 = vmatmul.bf16.gmra.mxu0 %v168
    %v179 = vpop.f32.mrf.mxu0
    %v180 = vadd.f32 %v154, %v179
    %v181 = vpop.f32.mrf.mxu0
    %v182 = vadd.f32 %v159, %v181
    %183 = vdwg.mxu0
    %v184 = vmax.f32 %v180, 0.0
    %v185 = vmax.f32 %v182, 0.0
    %v186 = vld [vmem:[%s5] sm:$0xff]
    %v187 = vld [vmem:[%s5 + $0x8] sm:$0xff]
    %189 = vset.pattern.permute.xlu0 0
    %190 = vperm.xlu0 %189, %v186
    %v191 = vpop.permute.xlu0 %190
    %194 = vset.pattern.permute.xlu0 0
    %195 = vperm.xlu0 %194, %v187
    %v196 = vpop.permute.xlu0 %195
    %v198 = vmul.f32 %v184, %v191
    %v199 = vmul.f32 %v185, %v196
    %v200 = vadd.f32 %v198, %v199
    %v201 = vrot.slane %v200, 4
    %v202 = vadd.f32 %v200, %v201
    %v203 = vrot.slane %v202, 2
    %v204 = vadd.f32 %v202, %v203
    %v205 = vrot.slane %v204, 1
    %v206 = vadd.f32 %v204, %v205
    %s207 = sld [smem:[#allocation2]]
    %v208 = vstv %s207
    %v209 = vadd.f32 %v206, %v208
    %v210 = vxor.u32 %v209, 2147483648
    %v211 = vmul.f32 %v210, 1.442695
    %v212 = vpow.pop %v211
    %v213 = vadd.f32 %v212, 1.0
    %v214 = vrcp.pop %v213
    %v215 = vmul.f32 %v213, %v214
    %v216 = vsub.f32 1.0, %v215
    %v217 = vmul.f32 %v214, %v216
    %v218 = vadd.f32 %v214, %v217
    %vm219 = vweird.f32 %v213
    %vm220 = vweird.f32 %v214
    %vm221 = vmor %vm219, %vm220
    %v222 = vsel %vm221, %v214, %v218
    %v223 = vand.u32 2147483647, %v213
    %vm224 = vcmp.eq.f32.partialorder %v223, 8.507059e+37
    %v225 = vand.u32 %v213, 2147483648
    %v226 = vor.u32 1.1754944e-38, %v225
    %v227 = vsel %vm224, %v226, %v222
    %v228 = vmul.f32 1.0, %v227
    %229 = vst [vmem:[#allocation3] sm:$0x1] %v228
    // Predicated region
    $region30: #{tpu_custom_call.1} parent=1 // pred_check
      _
    $region31: #{tpu_custom_call.1} parent=1 // pred_check_branch
      %231 = sbr.rel (0) target = $region33
    $region32: #{tpu_custom_call.1} parent=1 // pred_region
      %233 = vsyncadd [#allocation4], 0
      %s235 = sshll.u32 [#allocation3], 4
      %s236 = int_to_ptr.vmem [resolvable:$true] %s235
      %s237 = sshll.u32 %s7, 4
      %s238 = int_to_ptr.hbm [resolvable:$true] %s237
      %240 = dma.vmem_to_hbm [thread:$0]  %s236, 16, %s238, [#allocation4]
    $region33: #{tpu_custom_call.1} parent=1 // pred_fallthru
      _
    // Predicated region
    $region34: #{tpu_custom_call.1} parent=1 // pred_check
      _
    $region35: #{tpu_custom_call.1} parent=1 // pred_check_branch
      %242 = sbr.rel (0) target = $region37
    $region36: #{tpu_custom_call.1} parent=1 // pred_region
      %244 = dma.done [#allocation4], 16
    $region37: #{tpu_custom_call.1} parent=1 // pred_fallthru
      _
    %245 = vsyncpa [#allocation4], 1

</llo_original>
